<compile_context>
chip_gen: v7x
topology: tpu7x:2x2x1
jax: 0.10.0
libtpu: 0.0.40
codegen_flags: <defaults>
</compile_context>

<pallas_src>
import jax
import jax.numpy as jnp
from jax.experimental import pallas as pl
from jax.experimental.pallas import tpu as pltpu


def _round_up(x, m):
    return ((x + m - 1) // m) * m


def _default_tile_b(B):
    """One batch tile per TensorCore: grid=1 on v5e/v6e (1 TC), >=2 on 2-TC parts."""
    try:
        n_cores = int(getattr(jax.devices()[0], "num_cores", 1) or 1)
    except Exception:  # pragma: no cover - conservative fallback
        n_cores = 1
    n_cores = max(1, n_cores)
    tb = _round_up(max(pl.cdiv(B, n_cores), 8), 8)
    return min(tb, 1024)


def gesture_mlp_kernel(x_ref, w1_ref, b1_ref, w2_ref, b2_ref, o_ref):
    # fc1: (tb, K) @ (K, H) on the MXU; x cast to bf16 in-kernel (no wrapper op).
    x = x_ref[...].astype(jnp.bfloat16)
    h = jnp.dot(x, w1_ref[...], preferred_element_type=jnp.float32)
    # Bias + ReLU in f32 on the VPU.
    h = jnp.maximum(h + b1_ref[...], 0.0)
    # fc2: (tb, H) @ (H, 128) -> f32 accumulate, bias add, lane-dense store.
    out = jnp.dot(h.astype(w2_ref.dtype), w2_ref[...],
                  preferred_element_type=jnp.float32)
    o_ref[...] = (out + b2_ref[...]).astype(o_ref.dtype)


def prepare_params(w1, b1, w2, b2):
    """One-time parameter prep (do at init, NOT per forward call).

    w1: (input_size, hidden)   f32 -> bf16
    b1: (hidden,)              f32 -> (1, hidden) f32
    w2: (hidden, num_classes)  f32 -> (hidden, 128-padded) bf16
    b2: (num_classes,)         f32 -> (1, 128-padded) f32
    """
    H = w1.shape[1]
    N = w2.shape[1]
    N_pad = _round_up(max(N, 128), 128)
    w1_p = w1.astype(jnp.bfloat16)
    b1_p = b1.reshape(1, H).astype(jnp.float32)
    w2_p = jnp.pad(w2, ((0, 0), (0, N_pad - N))).astype(jnp.bfloat16)
    b2_p = jnp.pad(b2.reshape(1, N), ((0, 0), (0, N_pad - N))).astype(jnp.float32)
    return (w1_p, b1_p, w2_p, b2_p, N)


def gesture_model_forward(x, prepared, *, tile_b=None):
    """Fused fc1 -> relu -> fc2.  x: (B, input_size) f32 -> (B, num_classes) f32."""
    w1_p, b1_p, w2_p, b2_p, N = prepared
    B, K = x.shape
    H = w1_p.shape[1]
    N_pad = w2_p.shape[1]

    if tile_b is None:
        tile_b = _default_tile_b(B)
    tb = max(8, _round_up(min(tile_b, _round_up(B, 8)), 8))
    grid = (pl.cdiv(B, tb),)

    return pl.pallas_call(
        gesture_mlp_kernel,
        out_shape=jax.ShapeDtypeStruct((B, N), jnp.float32),
        grid_spec=pltpu.PrefetchScalarGridSpec(
            num_scalar_prefetch=0,
            grid=grid,
            in_specs=[
                # x: tiled along batch; K is the full array dim (no pad needed).
                pl.BlockSpec((tb, K), lambda i: (i, 0)),
                # Weights / biases: constant index maps -> VMEM-resident across
                # all grid steps (no re-DMA). They are tiny (<100 KiB), so the
                # default double-buffering cost is negligible; single-buffer
                # them (pipeline_mode) only if hidden_size grows large.
                pl.BlockSpec((K, H), lambda i: (0, 0)),
                pl.BlockSpec((1, H), lambda i: (0, 0)),
                pl.BlockSpec((H, N_pad), lambda i: (0, 0)),
                pl.BlockSpec((1, N_pad), lambda i: (0, 0)),
            ],
            # Kernel writes a lane-dense (tb, 128) f32 tile; only the valid
            # num_classes columns (and valid rows of a ragged last batch block)
            # are written back to the (B, N) HBM output.
            out_specs=pl.BlockSpec((tb, N_pad), lambda i: (i, 0)),
        ),
        compiler_params=pltpu.CompilerParams(
            dimension_semantics=("parallel",),
        ),
    )(x, w1_p, b1_p, w2_p, b2_p)


def init_params(key, input_size, hidden_size, num_classes):
    """Deterministic init mirroring nn.Linear's U(-1/sqrt(fan_in), 1/sqrt(fan_in))."""
    k1, k2, k3, k4 = jax.random.split(key, 4)
    bound1 = 1.0 / jnp.sqrt(input_size)
    bound2 = 1.0 / jnp.sqrt(hidden_size)
    w1 = jax.random.uniform(k1, (input_size, hidden_size), jnp.float32, -bound1, bound1)
    b1 = jax.random.uniform(k2, (hidden_size,), jnp.float32, -bound1, bound1)
    w2 = jax.random.uniform(k3, (hidden_size, num_classes), jnp.float32, -bound2, bound2)
    b2 = jax.random.uniform(k4, (num_classes,), jnp.float32, -bound2, bound2)
    return w1, b1, w2, b2


if __name__ == "__main__":
    # Small shapes consistent with the module's forward: x is (batch, input_size).
    batch = 512
    input_size = 64
    hidden_size = 128    # matches the script's hidden_size
    num_classes = 16

    key = jax.random.PRNGKey(0)
    kx, kp = jax.random.split(key)
    x = jax.random.normal(kx, (batch, input_size), jnp.float32)
    w1, b1, w2, b2 = init_params(kp, input_size, hidden_size, num_classes)

    # One-time parameter prep (pad + bf16 cast), done at init time.
    prepared = prepare_params(w1, b1, w2, b2)

    out = gesture_model_forward(x, prepared)
    out = jax.block_until_ready(out)
    assert out.shape == (batch, num_classes)

    # Reference matching the kernel's numerics (bf16 operands, f32 accumulate).
    f32 = jnp.float32
    xb = x.astype(jnp.bfloat16).astype(f32)
    w1b = w1.astype(jnp.bfloat16).astype(f32)
    w2b = w2.astype(jnp.bfloat16).astype(f32)
    h_ref = jnp.maximum(xb @ w1b + b1, 0.0)
    ref_bf16 = h_ref.astype(jnp.bfloat16).astype(f32) @ w2b + b2
    assert jnp.allclose(out, ref_bf16, atol=2e-3, rtol=2e-3)

    # Loose sanity check against the pure-f32 reference as well.
    ref_f32 = jnp.maximum(x @ w1 + b1, 0.0) @ w2 + b2
    assert jnp.allclose(out, ref_f32, atol=5e-2, rtol=5e-2)

    print("KERNEL_OK")
</pallas_src>

<mosaic_0001>
module attributes {stable_mosaic.version = 11 : i64} {
  func.func @gesture_mlp_kernel(%arg0: i32, %arg1: memref<512x64xf32, #tpu.memory_space<vmem>>, %arg2: memref<64x128xbf16, #tpu.memory_space<vmem>>, %arg3: memref<1x128xf32, #tpu.memory_space<vmem>>, %arg4: memref<128x128xbf16, #tpu.memory_space<vmem>>, %arg5: memref<1x128xf32, #tpu.memory_space<vmem>>, %arg6: memref<512x128xf32, #tpu.memory_space<vmem>>) attributes {dimension_semantics = [#tpu.dimension_semantics<parallel>], iteration_bounds = array<i64: 1>, scalar_prefetch = 0 : i64, scratch_operands = 0 : i64, tpu.core_type = #tpu.core_type<tc>, window_params = [{transform_indices = @transform_0, window_bounds = array<i64: 512, 64>}, {pipeline_mode = #tpu.pipeline_mode<synchronous>, transform_indices = @transform_1, window_bounds = array<i64: 64, 128>}, {pipeline_mode = #tpu.pipeline_mode<synchronous>, transform_indices = @transform_2, window_bounds = array<i64: 1, 128>}, {pipeline_mode = #tpu.pipeline_mode<synchronous>, transform_indices = @transform_3, window_bounds = array<i64: 128, 128>}, {pipeline_mode = #tpu.pipeline_mode<synchronous>, transform_indices = @transform_4, window_bounds = array<i64: 1, 128>}, {transform_indices = @transform_5, window_bounds = array<i64: 512, 128>}]} {
    %c0 = arith.constant 0 : index
    %c0_0 = arith.constant 0 : index
    %0 = vector.load %arg1[%c0, %c0_0] : memref<512x64xf32, #tpu.memory_space<vmem>>, vector<512x64xf32>
    %1 = arith.truncf %0 : vector<512x64xf32> to vector<512x64xbf16>
    %c0_1 = arith.constant 0 : index
    %c0_2 = arith.constant 0 : index
    %2 = vector.load %arg2[%c0_1, %c0_2] : memref<64x128xbf16, #tpu.memory_space<vmem>>, vector<64x128xbf16>
    %cst = arith.constant dense<0.000000e+00> : vector<512x128xf32>
    %3 = tpu.matmul %1, %2, %cst {dimension_numbers = #tpu.dot_dimension_numbers<[1], [0], [0], [1], [0, 0, 1, 1], [], []>} : vector<512x64xbf16>, vector<64x128xbf16>, vector<512x128xf32> -> vector<512x128xf32>
    %c0_3 = arith.constant 0 : index
    %c0_4 = arith.constant 0 : index
    %4 = vector.load %arg3[%c0_3, %c0_4] : memref<1x128xf32, #tpu.memory_space<vmem>>, vector<1x128xf32>
    %5 = vector.broadcast %4 : vector<1x128xf32> to vector<512x128xf32>
    %6 = arith.addf %3, %5 : vector<512x128xf32>
    %cst_5 = arith.constant 0.000000e+00 : f32
    %7 = vector.broadcast %cst_5 : f32 to vector<512x128xf32>
    %8 = arith.maximumf %6, %7 : vector<512x128xf32>
    %9 = arith.truncf %8 : vector<512x128xf32> to vector<512x128xbf16>
    %c0_6 = arith.constant 0 : index
    %c0_7 = arith.constant 0 : index
    %10 = vector.load %arg4[%c0_6, %c0_7] : memref<128x128xbf16, #tpu.memory_space<vmem>>, vector<128x128xbf16>
    %cst_8 = arith.constant dense<0.000000e+00> : vector<512x128xf32>
    %11 = tpu.matmul %9, %10, %cst_8 {dimension_numbers = #tpu.dot_dimension_numbers<[1], [0], [0], [1], [0, 0, 1, 1], [], []>} : vector<512x128xbf16>, vector<128x128xbf16>, vector<512x128xf32> -> vector<512x128xf32>
    %c0_9 = arith.constant 0 : index
    %c0_10 = arith.constant 0 : index
    %12 = vector.load %arg5[%c0_9, %c0_10] : memref<1x128xf32, #tpu.memory_space<vmem>>, vector<1x128xf32>
    %13 = vector.broadcast %12 : vector<1x128xf32> to vector<512x128xf32>
    %14 = arith.addf %11, %13 : vector<512x128xf32>
    %c0_11 = arith.constant 0 : index
    %c0_12 = arith.constant 0 : index
    %15 = vector.load %arg6[%c0_11, %c0_12] : memref<512x128xf32, #tpu.memory_space<vmem>>, vector<512x128xf32>
    tpu.vector_store %arg6[%c0_11, %c0_12], %14 {strides = array<i32>} : memref<512x128xf32, #tpu.memory_space<vmem>>, vector<512x128xf32>,
    return
  }
  func.func @transform_0(%arg0: i32) -> (i32, i32) {
    %c0_i32 = arith.constant 0 : i32
    %c0_i32_0 = arith.constant 0 : i32
    return %arg0, %c0_i32 : i32, i32
  }
  func.func @transform_1(%arg0: i32) -> (i32, i32) {
    %c0_i32 = arith.constant 0 : i32
    %c0_i32_0 = arith.constant 0 : i32
    %c0_i32_1 = arith.constant 0 : i32
    return %c0_i32, %c0_i32_0 : i32, i32
  }
  func.func @transform_2(%arg0: i32) -> (i32, i32) {
    %c0_i32 = arith.constant 0 : i32
    %c0_i32_0 = arith.constant 0 : i32
    %c0_i32_1 = arith.constant 0 : i32
    return %c0_i32, %c0_i32_0 : i32, i32
  }
  func.func @transform_3(%arg0: i32) -> (i32, i32) {
    %c0_i32 = arith.constant 0 : i32
    %c0_i32_0 = arith.constant 0 : i32
    %c0_i32_1 = arith.constant 0 : i32
    return %c0_i32, %c0_i32_0 : i32, i32
  }
  func.func @transform_4(%arg0: i32) -> (i32, i32) {
    %c0_i32 = arith.constant 0 : i32
    %c0_i32_0 = arith.constant 0 : i32
    %c0_i32_1 = arith.constant 0 : i32
    return %c0_i32, %c0_i32_0 : i32, i32
  }
  func.func @transform_5(%arg0: i32) -> (i32, i32) {
    %c0_i32 = arith.constant 0 : i32
    %c0_i32_0 = arith.constant 0 : i32
    return %arg0, %c0_i32 : i32, i32
  }
}

</mosaic_0001>

<llo_original>
// kernel: tpu_custom_call.1
$region0: #{tpu_custom_call.1}
  #allocation0 [shape = 'u32[]', space=smem, size = 0x4, offset = 0x4, fixed_abs, tag = 'smem constant byte address 0x4 - core index']
  #allocation1 [shape = 'u32[144,128]{1,0:T(1,128)}', space=vmem, size = 0x12000, scoped, tag = 'internal scratch']
  %s0 = inlined_call_operand.vmem [shape: f32[512,64], index: 0, kind: input, shape index: {}]
  %s1 = inlined_call_operand.vmem [shape: bf16[64,128], index: 1, kind: input, shape index: {}]
  %s2 = inlined_call_operand.vmem [shape: f32[1,128], index: 2, kind: input, shape index: {}]
  %s3 = inlined_call_operand.vmem [shape: bf16[128,128], index: 3, kind: input, shape index: {}]
  %s4 = inlined_call_operand.vmem [shape: f32[1,128], index: 4, kind: input, shape index: {}]
  %s5 = inlined_call_operand.vmem [shape: f32[512,16], index: 5, kind: output, shape index: {}]
  %s6 = sld [smem:[#allocation0]]
  $region30: #{tpu_custom_call.1} parent=0
    _
  %s8 = ssub.s32 1, %s6
  %s9 = scalar_select 0, %s8, %s6
  // Predicated region
  $region2: #{tpu_custom_call.1} parent=0 // pred_check
    _
  $region3: #{tpu_custom_call.1} parent=0 // pred_check_branch
    %11 = sbr.rel (0) target = $region5
  $region4: #{tpu_custom_call.1} parent=0 // pred_region
    _
  $region5: #{tpu_custom_call.1} parent=0 // pred_fallthru
    _
  // Predicated region
  $region6: #{tpu_custom_call.1} parent=0 // pred_check
    _
  $region7: #{tpu_custom_call.1} parent=0 // pred_check_branch
    %13 = sbr.rel (0) target = $region9
  $region8: #{tpu_custom_call.1} parent=0 // pred_region
    _
  $region9: #{tpu_custom_call.1} parent=0 // pred_fallthru
    _
  // Predicated region
  $region10: #{tpu_custom_call.1} parent=0 // pred_check
    _
  $region11: #{tpu_custom_call.1} parent=0 // pred_check_branch
    %15 = sbr.rel (0) target = $region13
  $region12: #{tpu_custom_call.1} parent=0 // pred_region
    _
  $region13: #{tpu_custom_call.1} parent=0 // pred_fallthru
    _
  // Predicated region
  $region14: #{tpu_custom_call.1} parent=0 // pred_check
    _
  $region15: #{tpu_custom_call.1} parent=0 // pred_check_branch
    %17 = sbr.rel (0) target = $region17
  $region16: #{tpu_custom_call.1} parent=0 // pred_region
    _
  $region17: #{tpu_custom_call.1} parent=0 // pred_fallthru
    _
  // Predicated region
  $region18: #{tpu_custom_call.1} parent=0 // pred_check
    _
  $region19: #{tpu_custom_call.1} parent=0 // pred_check_branch
    %19 = sbr.rel (0) target = $region21
  $region20: #{tpu_custom_call.1} parent=0 // pred_region
    _
  $region21: #{tpu_custom_call.1} parent=0 // pred_fallthru
    _
  %v21 = vld [vmem:[%s0] sm:$0xff]
  %v22 = vld [vmem:[%s0 + $0x8] sm:$0xff]
  %v23 = vld [vmem:[%s0 + $0x10] sm:$0xff]
  %v24 = vld [vmem:[%s0 + $0x18] sm:$0xff]
  %v25 = vld [vmem:[%s0 + $0x20] sm:$0xff]
  %v26 = vld [vmem:[%s0 + $0x28] sm:$0xff]
  %v27 = vld [vmem:[%s0 + $0x30] sm:$0xff]
  %v28 = vld [vmem:[%s0 + $0x38] sm:$0xff]
  %v29 = vld [vmem:[%s0 + $0x40] sm:$0xff]
  %v30 = vld [vmem:[%s0 + $0x48] sm:$0xff]
  %v31 = vld [vmem:[%s0 + $0x50] sm:$0xff]
  %v32 = vld [vmem:[%s0 + $0x58] sm:$0xff]
  %v33 = vld [vmem:[%s0 + $0x60] sm:$0xff]
  %v34 = vld [vmem:[%s0 + $0x68] sm:$0xff]
  %v35 = vld [vmem:[%s0 + $0x70] sm:$0xff]
  %v36 = vld [vmem:[%s0 + $0x78] sm:$0xff]
  %v37 = vld [vmem:[%s0 + $0x80] sm:$0xff]
  %v38 = vld [vmem:[%s0 + $0x88] sm:$0xff]
  %v39 = vld [vmem:[%s0 + $0x90] sm:$0xff]
  %v40 = vld [vmem:[%s0 + $0x98] sm:$0xff]
  %v41 = vld [vmem:[%s0 + $0xa0] sm:$0xff]
  %v42 = vld [vmem:[%s0 + $0xa8] sm:$0xff]
  %v43 = vld [vmem:[%s0 + $0xb0] sm:$0xff]
  %v44 = vld [vmem:[%s0 + $0xb8] sm:$0xff]
  %v45 = vld [vmem:[%s0 + $0xc0] sm:$0xff]
  %v46 = vld [vmem:[%s0 + $0xc8] sm:$0xff]
  %v47 = vld [vmem:[%s0 + $0xd0] sm:$0xff]
  %v48 = vld [vmem:[%s0 + $0xd8] sm:$0xff]
  %v49 = vld [vmem:[%s0 + $0xe0] sm:$0xff]
  %v50 = vld [vmem:[%s0 + $0xe8] sm:$0xff]
  %v51 = vld [vmem:[%s0 + $0xf0] sm:$0xff]
  %v52 = vld [vmem:[%s0 + $0xf8] sm:$0xff]
  %v53 = vld [vmem:[%s0 + $0x100] sm:$0xff]
  %v54 = vld [vmem:[%s0 + $0x108] sm:$0xff]
  %v55 = vld [vmem:[%s0 + $0x110] sm:$0xff]
  %v56 = vld [vmem:[%s0 + $0x118] sm:$0xff]
  %v57 = vld [vmem:[%s0 + $0x120] sm:$0xff]
  %v58 = vld [vmem:[%s0 + $0x128] sm:$0xff]
  %v59 = vld [vmem:[%s0 + $0x130] sm:$0xff]
  %v60 = vld [vmem:[%s0 + $0x138] sm:$0xff]
  %v61 = vld [vmem:[%s0 + $0x140] sm:$0xff]
  %v62 = vld [vmem:[%s0 + $0x148] sm:$0xff]
  %v63 = vld [vmem:[%s0 + $0x150] sm:$0xff]
  %v64 = vld [vmem:[%s0 + $0x158] sm:$0xff]
  %v65 = vld [vmem:[%s0 + $0x160] sm:$0xff]
  %v66 = vld [vmem:[%s0 + $0x168] sm:$0xff]
  %v67 = vld [vmem:[%s0 + $0x170] sm:$0xff]
  %v68 = vld [vmem:[%s0 + $0x178] sm:$0xff]
  %v69 = vld [vmem:[%s0 + $0x180] sm:$0xff]
  %v70 = vld [vmem:[%s0 + $0x188] sm:$0xff]
  %v71 = vld [vmem:[%s0 + $0x190] sm:$0xff]
  %v72 = vld [vmem:[%s0 + $0x198] sm:$0xff]
  %v73 = vld [vmem:[%s0 + $0x1a0] sm:$0xff]
  %v74 = vld [vmem:[%s0 + $0x1a8] sm:$0xff]
  %v75 = vld [vmem:[%s0 + $0x1b0] sm:$0xff]
  %v76 = vld [vmem:[%s0 + $0x1b8] sm:$0xff]
  %v77 = vld [vmem:[%s0 + $0x1c0] sm:$0xff]
  %v78 = vld [vmem:[%s0 + $0x1c8] sm:$0xff]
  %v79 = vld [vmem:[%s0 + $0x1d0] sm:$0xff]
  %v80 = vld [vmem:[%s0 + $0x1d8] sm:$0xff]
  %v81 = vld [vmem:[%s0 + $0x1e0] sm:$0xff]
  %v82 = vld [vmem:[%s0 + $0x1e8] sm:$0xff]
  %v83 = vld [vmem:[%s0 + $0x1f0] sm:$0xff]
  %v84 = vld [vmem:[%s0 + $0x1f8] sm:$0xff]
  %v85 = vpack.c.bf16 %v22, %v21
  %v86 = vpack.c.bf16 %v24, %v23
  %v87 = vpack.c.bf16 %v26, %v25
  %v88 = vpack.c.bf16 %v28, %v27
  %v89 = vpack.c.bf16 %v30, %v29
  %v90 = vpack.c.bf16 %v32, %v31
  %v91 = vpack.c.bf16 %v34, %v33
  %v92 = vpack.c.bf16 %v36, %v35
  %v93 = vpack.c.bf16 %v38, %v37
  %v94 = vpack.c.bf16 %v40, %v39
  %v95 = vpack.c.bf16 %v42, %v41
  %v96 = vpack.c.bf16 %v44, %v43
  %v97 = vpack.c.bf16 %v46, %v45
  %v98 = vpack.c.bf16 %v48, %v47
  %v99 = vpack.c.bf16 %v50, %v49
  %v100 = vpack.c.bf16 %v52, %v51
  %v101 = vpack.c.bf16 %v54, %v53
  %v102 = vpack.c.bf16 %v56, %v55
  %v103 = vpack.c.bf16 %v58, %v57
  %v104 = vpack.c.bf16 %v60, %v59
  %v105 = vpack.c.bf16 %v62, %v61
  %v106 = vpack.c.bf16 %v64, %v63
  %v107 = vpack.c.bf16 %v66, %v65
  %v108 = vpack.c.bf16 %v68, %v67
  %v109 = vpack.c.bf16 %v70, %v69
  %v110 = vpack.c.bf16 %v72, %v71
  %v111 = vpack.c.bf16 %v74, %v73
  %v112 = vpack.c.bf16 %v76, %v75
  %v113 = vpack.c.bf16 %v78, %v77
  %v114 = vpack.c.bf16 %v80, %v79
  %v115 = vpack.c.bf16 %v82, %v81
  %v116 = vpack.c.bf16 %v84, %v83
  %v117 = vld [vmem:[%s1] sm:$0xf]
  %v118 = vld [vmem:[%s1 + $0x4] sm:$0xf]
  %v119 = vld [vmem:[%s1 + $0x8] sm:$0xf]
  %v120 = vld [vmem:[%s1 + $0xc] sm:$0xf]
  %v121 = vld [vmem:[%s1 + $0x10] sm:$0xf]
  %v122 = vld [vmem:[%s1 + $0x14] sm:$0xf]
  %v123 = vld [vmem:[%s1 + $0x18] sm:$0xf]
  %v124 = vld [vmem:[%s1 + $0x1c] sm:$0xf]
  %v125 = vld [vmem:[%s2] sm:$0x1]
  %v127 = vlaneseq
  %v128 = vshrl.u32 %v127, 7
  %v129 = vsub.s32 0, %v128
  %v130 = vrot.slane %v125, %v129
  %v140 = vunpack.c.l.b16 %v117
  %v141 = vunpack.c.l.b16 %v118
  %v142 = vunpack.c.l.b16 %v119
  %v143 = vunpack.c.l.b16 %v120
  %v144 = vunpack.c.l.b16 %v121
  %v145 = vunpack.c.l.b16 %v122
  %v146 = vunpack.c.l.b16 %v123
  %v147 = vunpack.c.l.b16 %v124
  %v148 = vpack.c.b16 %v141, %v140
  %v149 = vpack.c.b16 %v143, %v142
  %v150 = vpack.c.b16 %v145, %v144
  %v151 = vpack.c.b16 %v147, %v146
  %vm156 = vcmask 523264
  %v158 = vsel %vm156, %v85, 0
  %v161 = vsel %vm156, %v86, 0
  %v164 = vsel %vm156, %v87, 0
  %v167 = vsel %vm156, %v88, 0
  %v170 = vsel %vm156, %v89, 0
  %v173 = vsel %vm156, %v90, 0
  %v176 = vsel %vm156, %v91, 0
  %v179 = vsel %vm156, %v92, 0
  %v182 = vsel %vm156, %v93, 0
  %v185 = vsel %vm156, %v94, 0
  %v188 = vsel %vm156, %v95, 0
  %v191 = vsel %vm156, %v96, 0
  %v194 = vsel %vm156, %v97, 0
  %v197 = vsel %vm156, %v98, 0
  %v200 = vsel %vm156, %v99, 0
  %v203 = vsel %vm156, %v100, 0
  %v206 = vsel %vm156, %v101, 0
  %v209 = vsel %vm156, %v102, 0
  %v212 = vsel %vm156, %v103, 0
  %v215 = vsel %vm156, %v104, 0
  %v218 = vsel %vm156, %v105, 0
  %v221 = vsel %vm156, %v106, 0
  %v224 = vsel %vm156, %v107, 0
  %v227 = vsel %vm156, %v108, 0
  %v230 = vsel %vm156, %v109, 0
  %v233 = vsel %vm156, %v110, 0
  %v236 = vsel %vm156, %v111, 0
  %v239 = vsel %vm156, %v112, 0
  %v242 = vsel %vm156, %v113, 0
  %v245 = vsel %vm156, %v114, 0
  %v248 = vsel %vm156, %v115, 0
  %v251 = vsel %vm156, %v116, 0
  %253 = vmatprep.subr.bf16.mxu0 0
  %254 = vmatpush1.bf16.msra.mxu0 %v148
  %255 = vmatprep.subr.bf16.mxu0 0
  %256 = vmatpush1.bf16.msra.mxu0 %v149
  %257 = vmatprep.subr.bf16.mxu0 0
  %258 = vmatpush1.bf16.msra.mxu0 %v150
  %259 = vmatprep.subr.bf16.mxu0 0
  %260 = vmatpush1.bf16.msra.mxu0 %v151
  %261 = vmatprep.subr.bf16.mxu0 0
  %262 = vmatpush1.bf16.msra.mxu0 0
  %263 = vmatprep.subr.bf16.mxu0 0
  %264 = vmatpush1.bf16.msra.mxu0 0
  %265 = vmatprep.subr.bf16.mxu0 0
  %266 = vmatpush1.bf16.msra.mxu0 0
  %267 = vmatprep.subr.bf16.mxu0 0
  %268 = vmatpush1.bf16.msra.mxu0 0
  %269 = vmatprep.subr.bf16.mxu0 0
  %270 = vmatpush1.bf16.msra.mxu0 0
  %271 = vmatprep.subr.bf16.mxu0 0
  %272 = vmatpush1.bf16.msra.mxu0 0
  %273 = vmatprep.subr.bf16.mxu0 0
  %274 = vmatpush1.bf16.msra.mxu0 0
  %275 = vmatprep.subr.bf16.mxu0 0
  %276 = vmatpush1.bf16.msra.mxu0 0
  %277 = vmatprep.subr.bf16.mxu0 0
  %278 = vmatpush1.bf16.msra.mxu0 0
  %279 = vmatprep.subr.bf16.mxu0 0
  %280 = vmatpush1.bf16.msra.mxu0 0
  %281 = vmatprep.subr.bf16.mxu0 0
  %282 = vmatpush1.bf16.msra.mxu0 0
  %283 = vmatprep.subr.bf16.mxu0 0
  %284 = vmatpush1.bf16.msra.mxu0 0
  %285 = vmatprep.mubr.bf16.mxu0 0
  %286 = vmatmul.mubr.bf16.gmra.mrb[0].mxu0 %v158
  %v287 = vpop.f32.mrb[0].mxu0
  %v288 = vadd.f32 %v130, %v287
  %v289 = vpop.f32.mrb[0].mxu0
  %v290 = vpop.f32.mrb[0].mxu0
  %v291 = vadd.f32 %v130, %v290
  %v292 = vpop.f32.mrb[0].mxu0
  %293 = vmatprep.mubr.bf16.mxu0 0
  %294 = vmatmul.mubr.bf16.gmra.mrb[0].mxu0 %v161
  %v295 = vpop.f32.mrb[0].mxu0
  %v296 = vadd.f32 %v130, %v295
  %v297 = vpop.f32.mrb[0].mxu0
  %v298 = vpop.f32.mrb[0].mxu0
  %v299 = vadd.f32 %v130, %v298
  %v300 = vpop.f32.mrb[0].mxu0
  %301 = vmatprep.mubr.bf16.mxu0 0
  %302 = vmatmul.mubr.bf16.gmra.mrb[0].mxu0 %v164
  %v303 = vpop.f32.mrb[0].mxu0
  %v304 = vadd.f32 %v130, %v303
  %v305 = vpop.f32.mrb[0].mxu0
  %v306 = vpop.f32.mrb[0].mxu0
  %v307 = vadd.f32 %v130, %v306
  %v308 = vpop.f32.mrb[0].mxu0
  %309 = vmatprep.mubr.bf16.mxu0 0
  %310 = vmatmul.mubr.bf16.gmra.mrb[0].mxu0 %v167
  %v311 = vpop.f32.mrb[0].mxu0
  %v312 = vadd.f32 %v130, %v311
  %v313 = vpop.f32.mrb[0].mxu0
  %v314 = vpop.f32.mrb[0].mxu0
  %v315 = vadd.f32 %v130, %v314
  %v316 = vpop.f32.mrb[0].mxu0
  %317 = vmatprep.mubr.bf16.mxu0 0
  %318 = vmatmul.mubr.bf16.gmra.mrb[0].mxu0 %v170
  %v319 = vpop.f32.mrb[0].mxu0
  %v320 = vadd.f32 %v130, %v319
  %v321 = vpop.f32.mrb[0].mxu0
  %v322 = vpop.f32.mrb[0].mxu0
  %v323 = vadd.f32 %v130, %v322
  %v324 = vpop.f32.mrb[0].mxu0
  %325 = vmatprep.mubr.bf16.mxu0 0
  %326 = vmatmul.mubr.bf16.gmra.mrb[0].mxu0 %v173
  %v327 = vpop.f32.mrb[0].mxu0
  %v328 = vadd.f32 %v130, %v327
  %v329 = vpop.f32.mrb[0].mxu0
  %v330 = vpop.f32.mrb[0].mxu0
  %v331 = vadd.f32 %v130, %v330
  %v332 = vpop.f32.mrb[0].mxu0
  %333 = vmatprep.mubr.bf16.mxu0 0
  %334 = vmatmul.mubr.bf16.gmra.mrb[0].mxu0 %v176
  %v335 = vpop.f32.mrb[0].mxu0
  %v336 = vadd.f32 %v130, %v335
  %v337 = vpop.f32.mrb[0].mxu0
  %v338 = vpop.f32.mrb[0].mxu0
  %v339 = vadd.f32 %v130, %v338
  %v340 = vpop.f32.mrb[0].mxu0
  %341 = vmatprep.mubr.bf16.mxu0 0
  %342 = vmatmul.mubr.bf16.gmra.mrb[0].mxu0 %v179
  %v343 = vpop.f32.mrb[0].mxu0
  %v344 = vadd.f32 %v130, %v343
  %v345 = vpop.f32.mrb[0].mxu0
  %v346 = vpop.f32.mrb[0].mxu0
  %v347 = vadd.f32 %v130, %v346
  %v348 = vpop.f32.mrb[0].mxu0
  %349 = vmatprep.mubr.bf16.mxu0 0
  %350 = vmatmul.mubr.bf16.gmra.mrb[0].mxu0 %v182
  %v351 = vpop.f32.mrb[0].mxu0
  %v352 = vadd.f32 %v130, %v351
  %v353 = vpop.f32.mrb[0].mxu0
  %v354 = vpop.f32.mrb[0].mxu0
  %v355 = vadd.f32 %v130, %v354
  %v356 = vpop.f32.mrb[0].mxu0
  %357 = vmatprep.mubr.bf16.mxu0 0
  %358 = vmatmul.mubr.bf16.gmra.mrb[0].mxu0 %v185
  %v359 = vpop.f32.mrb[0].mxu0
  %v360 = vadd.f32 %v130, %v359
  %v361 = vpop.f32.mrb[0].mxu0
  %v362 = vpop.f32.mrb[0].mxu0
  %v363 = vadd.f32 %v130, %v362
  %v364 = vpop.f32.mrb[0].mxu0
  %365 = vmatprep.mubr.bf16.mxu0 0
  %366 = vmatmul.mubr.bf16.gmra.mrb[0].mxu0 %v188
  %v367 = vpop.f32.mrb[0].mxu0
  %v368 = vadd.f32 %v130, %v367
  %v369 = vpop.f32.mrb[0].mxu0
  %v370 = vpop.f32.mrb[0].mxu0
  %v371 = vadd.f32 %v130, %v370
  %v372 = vpop.f32.mrb[0].mxu0
  %373 = vmatprep.mubr.bf16.mxu0 0
  %374 = vmatmul.mubr.bf16.gmra.mrb[0].mxu0 %v191
  %v375 = vpop.f32.mrb[0].mxu0
  %v376 = vadd.f32 %v130, %v375
  %v377 = vpop.f32.mrb[0].mxu0
  %v378 = vpop.f32.mrb[0].mxu0
  %v379 = vadd.f32 %v130, %v378
  %v380 = vpop.f32.mrb[0].mxu0
  %381 = vmatprep.mubr.bf16.mxu0 0
  %382 = vmatmul.mubr.bf16.gmra.mrb[0].mxu0 %v194
  %v383 = vpop.f32.mrb[0].mxu0
  %v384 = vadd.f32 %v130, %v383
  %v385 = vpop.f32.mrb[0].mxu0
  %v386 = vpop.f32.mrb[0].mxu0
  %v387 = vadd.f32 %v130, %v386
  %v388 = vpop.f32.mrb[0].mxu0
  %389 = vmatprep.mubr.bf16.mxu0 0
  %390 = vmatmul.mubr.bf16.gmra.mrb[0].mxu0 %v197
  %v391 = vpop.f32.mrb[0].mxu0
  %v392 = vadd.f32 %v130, %v391
  %v393 = vpop.f32.mrb[0].mxu0
  %v394 = vpop.f32.mrb[0].mxu0
  %v395 = vadd.f32 %v130, %v394
  %v396 = vpop.f32.mrb[0].mxu0
  %397 = vmatprep.mubr.bf16.mxu0 0
  %398 = vmatmul.mubr.bf16.gmra.mrb[0].mxu0 %v200
  %v399 = vpop.f32.mrb[0].mxu0
  %v400 = vadd.f32 %v130, %v399
  %v401 = vpop.f32.mrb[0].mxu0
  %v402 = vpop.f32.mrb[0].mxu0
  %v403 = vadd.f32 %v130, %v402
  %v404 = vpop.f32.mrb[0].mxu0
  %405 = vmatprep.mubr.bf16.mxu0 0
  %406 = vmatmul.mubr.bf16.gmra.mrb[0].mxu0 %v203
  %v407 = vpop.f32.mrb[0].mxu0
  %v408 = vadd.f32 %v130, %v407
  %v409 = vpop.f32.mrb[0].mxu0
  %v410 = vpop.f32.mrb[0].mxu0
  %v411 = vadd.f32 %v130, %v410
  %v412 = vpop.f32.mrb[0].mxu0
  %413 = vmatprep.mubr.bf16.mxu0 0
  %414 = vmatmul.mubr.bf16.gmra.mrb[0].mxu0 %v206
  %v415 = vpop.f32.mrb[0].mxu0
  %v416 = vadd.f32 %v130, %v415
  %v417 = vpop.f32.mrb[0].mxu0
  %v418 = vpop.f32.mrb[0].mxu0
  %v419 = vadd.f32 %v130, %v418
  %v420 = vpop.f32.mrb[0].mxu0
  %421 = vmatprep.mubr.bf16.mxu0 0
  %422 = vmatmul.mubr.bf16.gmra.mrb[0].mxu0 %v209
  %v423 = vpop.f32.mrb[0].mxu0
  %v424 = vadd.f32 %v130, %v423
  %v425 = vpop.f32.mrb[0].mxu0
  %v426 = vpop.f32.mrb[0].mxu0
  %v427 = vadd.f32 %v130, %v426
  %v428 = vpop.f32.mrb[0].mxu0
  %429 = vmatprep.mubr.bf16.mxu0 0
  %430 = vmatmul.mubr.bf16.gmra.mrb[0].mxu0 %v212
  %v431 = vpop.f32.mrb[0].mxu0
  %v432 = vadd.f32 %v130, %v431
  %v433 = vpop.f32.mrb[0].mxu0
  %v434 = vpop.f32.mrb[0].mxu0
  %v435 = vadd.f32 %v130, %v434
  %v436 = vpop.f32.mrb[0].mxu0
  %437 = vmatprep.mubr.bf16.mxu0 0
  %438 = vmatmul.mubr.bf16.gmra.mrb[0].mxu0 %v215
  %v439 = vpop.f32.mrb[0].mxu0
  %v440 = vadd.f32 %v130, %v439
  %v441 = vpop.f32.mrb[0].mxu0
  %v442 = vpop.f32.mrb[0].mxu0
  %v443 = vadd.f32 %v130, %v442
  %v444 = vpop.f32.mrb[0].mxu0
  %445 = vmatprep.mubr.bf16.mxu0 0
  %446 = vmatmul.mubr.bf16.gmra.mrb[0].mxu0 %v218
  %v447 = vpop.f32.mrb[0].mxu0
  %v448 = vadd.f32 %v130, %v447
  %v449 = vpop.f32.mrb[0].mxu0
  %v450 = vpop.f32.mrb[0].mxu0
  %v451 = vadd.f32 %v130, %v450
  %v452 = vpop.f32.mrb[0].mxu0
  %453 = vmatprep.mubr.bf16.mxu0 0
  %454 = vmatmul.mubr.bf16.gmra.mrb[0].mxu0 %v221
  %v455 = vpop.f32.mrb[0].mxu0
  %v456 = vadd.f32 %v130, %v455
  %v457 = vpop.f32.mrb[0].mxu0
  %v458 = vpop.f32.mrb[0].mxu0
  %v459 = vadd.f32 %v130, %v458
  %v460 = vpop.f32.mrb[0].mxu0
  %461 = vmatprep.mubr.bf16.mxu0 0
  %462 = vmatmul.mubr.bf16.gmra.mrb[0].mxu0 %v224
  %v463 = vpop.f32.mrb[0].mxu0
  %v464 = vadd.f32 %v130, %v463
  %v465 = vpop.f32.mrb[0].mxu0
  %v466 = vpop.f32.mrb[0].mxu0
  %v467 = vadd.f32 %v130, %v466
  %v468 = vpop.f32.mrb[0].mxu0
  %469 = vmatprep.mubr.bf16.mxu0 0
  %470 = vmatmul.mubr.bf16.gmra.mrb[0].mxu0 %v227
  %v471 = vpop.f32.mrb[0].mxu0
  %v472 = vadd.f32 %v130, %v471
  %v473 = vpop.f32.mrb[0].mxu0
  %v474 = vpop.f32.mrb[0].mxu0
  %v475 = vadd.f32 %v130, %v474
  %v476 = vpop.f32.mrb[0].mxu0
  %477 = vmatprep.mubr.bf16.mxu0 0
  %478 = vmatmul.mubr.bf16.gmra.mrb[0].mxu0 %v230
  %v479 = vpop.f32.mrb[0].mxu0
  %v480 = vadd.f32 %v130, %v479
  %v481 = vpop.f32.mrb[0].mxu0
  %v482 = vpop.f32.mrb[0].mxu0
  %v483 = vadd.f32 %v130, %v482
  %v484 = vpop.f32.mrb[0].mxu0
  %485 = vmatprep.mubr.bf16.mxu0 0
  %486 = vmatmul.mubr.bf16.gmra.mrb[0].mxu0 %v233
  %v487 = vpop.f32.mrb[0].mxu0
  %v488 = vadd.f32 %v130, %v487
  %v489 = vpop.f32.mrb[0].mxu0
  %v490 = vpop.f32.mrb[0].mxu0
  %v491 = vadd.f32 %v130, %v490
  %v492 = vpop.f32.mrb[0].mxu0
  %493 = vmatprep.mubr.bf16.mxu0 0
  %494 = vmatmul.mubr.bf16.gmra.mrb[0].mxu0 %v236
  %v495 = vpop.f32.mrb[0].mxu0
  %v496 = vadd.f32 %v130, %v495
  %v497 = vpop.f32.mrb[0].mxu0
  %v498 = vpop.f32.mrb[0].mxu0
  %v499 = vadd.f32 %v130, %v498
  %v500 = vpop.f32.mrb[0].mxu0
  %501 = vmatprep.mubr.bf16.mxu0 0
  %502 = vmatmul.mubr.bf16.gmra.mrb[0].mxu0 %v239
  %v503 = vpop.f32.mrb[0].mxu0
  %v504 = vadd.f32 %v130, %v503
  %v505 = vpop.f32.mrb[0].mxu0
  %v506 = vpop.f32.mrb[0].mxu0
  %v507 = vadd.f32 %v130, %v506
  %v508 = vpop.f32.mrb[0].mxu0
  %509 = vmatprep.mubr.bf16.mxu0 0
  %510 = vmatmul.mubr.bf16.gmra.mrb[0].mxu0 %v242
  %v511 = vpop.f32.mrb[0].mxu0
  %v512 = vadd.f32 %v130, %v511
  %v513 = vpop.f32.mrb[0].mxu0
  %v514 = vpop.f32.mrb[0].mxu0
  %v515 = vadd.f32 %v130, %v514
  %v516 = vpop.f32.mrb[0].mxu0
  %517 = vmatprep.mubr.bf16.mxu0 0
  %518 = vmatmul.mubr.bf16.gmra.mrb[0].mxu0 %v245
  %v519 = vpop.f32.mrb[0].mxu0
  %v520 = vadd.f32 %v130, %v519
  %v521 = vpop.f32.mrb[0].mxu0
  %v522 = vpop.f32.mrb[0].mxu0
  %v523 = vadd.f32 %v130, %v522
  %v524 = vpop.f32.mrb[0].mxu0
  %525 = vmatprep.mubr.bf16.mxu0 0
  %526 = vmatmul.mubr.bf16.gmra.mrb[0].mxu0 %v248
  %v527 = vpop.f32.mrb[0].mxu0
  %v528 = vadd.f32 %v130, %v527
  %v529 = vpop.f32.mrb[0].mxu0
  %v530 = vpop.f32.mrb[0].mxu0
  %v531 = vadd.f32 %v130, %v530
  %v532 = vpop.f32.mrb[0].mxu0
  %533 = vmatprep.mubr.bf16.mxu0 0
  %534 = vmatmul.mubr.bf16.gmra.mrb[0].mxu0 %v251
  %v535 = vpop.f32.mrb[0].mxu0
  %v536 = vadd.f32 %v130, %v535
  %v537 = vpop.f32.mrb[0].mxu0
  %v538 = vpop.f32.mrb[0].mxu0
  %v539 = vadd.f32 %v130, %v538
  %v540 = vpop.f32.mrb[0].mxu0
  %541 = vdwg.mxu0
  %v542 = vmax.f32 %v288, 0.0
  %v543 = vmax.f32 %v291, 0.0
  %v544 = vmax.f32 %v296, 0.0
  %v545 = vmax.f32 %v299, 0.0
  %v546 = vmax.f32 %v304, 0.0
  %v547 = vmax.f32 %v307, 0.0
  %v548 = vmax.f32 %v312, 0.0
  %v549 = vmax.f32 %v315, 0.0
  %v550 = vmax.f32 %v320, 0.0
  %v551 = vmax.f32 %v323, 0.0
  %v552 = vmax.f32 %v328, 0.0
  %v553 = vmax.f32 %v331, 0.0
  %v554 = vmax.f32 %v336, 0.0
  %v555 = vmax.f32 %v339, 0.0
  %v556 = vmax.f32 %v344, 0.0
  %v557 = vmax.f32 %v347, 0.0
  %v558 = vmax.f32 %v352, 0.0
  %v559 = vmax.f32 %v355, 0.0
  %v560 = vmax.f32 %v360, 0.0
  %v561 = vmax.f32 %v363, 0.0
  %v562 = vmax.f32 %v368, 0.0
  %v563 = vmax.f32 %v371, 0.0
  %v564 = vmax.f32 %v376, 0.0
  %v565 = vmax.f32 %v379, 0.0
  %v566 = vmax.f32 %v384, 0.0
  %v567 = vmax.f32 %v387, 0.0
  %v568 = vmax.f32 %v392, 0.0
  %v569 = vmax.f32 %v395, 0.0
  %v570 = vmax.f32 %v400, 0.0
  %v571 = vmax.f32 %v403, 0.0
  %v572 = vmax.f32 %v408, 0.0
  %v573 = vmax.f32 %v411, 0.0
  %v574 = vmax.f32 %v416, 0.0
  %v575 = vmax.f32 %v419, 0.0
  %v576 = vmax.f32 %v424, 0.0
  %v577 = vmax.f32 %v427, 0.0
  %v578 = vmax.f32 %v432, 0.0
  %v579 = vmax.f32 %v435, 0.0
  %v580 = vmax.f32 %v440, 0.0
  %v581 = vmax.f32 %v443, 0.0
  %v582 = vmax.f32 %v448, 0.0
  %v583 = vmax.f32 %v451, 0.0
  %v584 = vmax.f32 %v456, 0.0
  %v585 = vmax.f32 %v459, 0.0
  %v586 = vmax.f32 %v464, 0.0
  %v587 = vmax.f32 %v467, 0.0
  %v588 = vmax.f32 %v472, 0.0
  %v589 = vmax.f32 %v475, 0.0
  %v590 = vmax.f32 %v480, 0.0
  %v591 = vmax.f32 %v483, 0.0
  %v592 = vmax.f32 %v488, 0.0
  %v593 = vmax.f32 %v491, 0.0
  %v594 = vmax.f32 %v496, 0.0
  %v595 = vmax.f32 %v499, 0.0
  %v596 = vmax.f32 %v504, 0.0
  %v597 = vmax.f32 %v507, 0.0
  %v598 = vmax.f32 %v512, 0.0
  %v599 = vmax.f32 %v515, 0.0
  %v600 = vmax.f32 %v520, 0.0
  %v601 = vmax.f32 %v523, 0.0
  %v602 = vmax.f32 %v528, 0.0
  %v603 = vmax.f32 %v531, 0.0
  %v604 = vmax.f32 %v536, 0.0
  %v605 = vmax.f32 %v539, 0.0
  %v606 = vpack.c.bf16 %v543, %v542
  %v607 = vpack.c.bf16 %v545, %v544
  %v608 = vpack.c.bf16 %v547, %v546
  %v609 = vpack.c.bf16 %v549, %v548
  %v610 = vpack.c.bf16 %v551, %v550
  %v611 = vpack.c.bf16 %v553, %v552
  %v612 = vpack.c.bf16 %v555, %v554
  %v613 = vpack.c.bf16 %v557, %v556
  %v614 = vpack.c.bf16 %v559, %v558
  %v615 = vpack.c.bf16 %v561, %v560
  %v616 = vpack.c.bf16 %v563, %v562
  %v617 = vpack.c.bf16 %v565, %v564
  %v618 = vpack.c.bf16 %v567, %v566
  %v619 = vpack.c.bf16 %v569, %v568
  %v620 = vpack.c.bf16 %v571, %v570
  %v621 = vpack.c.bf16 %v573, %v572
  %v622 = vpack.c.bf16 %v575, %v574
  %v623 = vpack.c.bf16 %v577, %v576
  %v624 = vpack.c.bf16 %v579, %v578
  %v625 = vpack.c.bf16 %v581, %v580
  %v626 = vpack.c.bf16 %v583, %v582
  %v627 = vpack.c.bf16 %v585, %v584
  %v628 = vpack.c.bf16 %v587, %v586
  %v629 = vpack.c.bf16 %v589, %v588
  %v630 = vpack.c.bf16 %v591, %v590
  %v631 = vpack.c.bf16 %v593, %v592
  %v632 = vpack.c.bf16 %v595, %v594
  %v633 = vpack.c.bf16 %v597, %v596
  %v634 = vpack.c.bf16 %v599, %v598
  %v635 = vpack.c.bf16 %v601, %v600
  %v636 = vpack.c.bf16 %v603, %v602
  %v637 = vpack.c.bf16 %v605, %v604
  %v638 = vld [vmem:[%s3] sm:$0xf]
  %v639 = vld [vmem:[%s3 + $0x4] sm:$0xf]
  %v640 = vld [vmem:[%s3 + $0x8] sm:$0xf]
  %v641 = vld [vmem:[%s3 + $0xc] sm:$0xf]
  %v642 = vld [vmem:[%s3 + $0x10] sm:$0xf]
  %v643 = vld [vmem:[%s3 + $0x14] sm:$0xf]
  %v644 = vld [vmem:[%s3 + $0x18] sm:$0xf]
  %v645 = vld [vmem:[%s3 + $0x1c] sm:$0xf]
  %v646 = vld [vmem:[%s3 + $0x20] sm:$0xf]
  %v647 = vld [vmem:[%s3 + $0x24] sm:$0xf]
  %v648 = vld [vmem:[%s3 + $0x28] sm:$0xf]
  %v649 = vld [vmem:[%s3 + $0x2c] sm:$0xf]
  %v650 = vld [vmem:[%s3 + $0x30] sm:$0xf]
  %v651 = vld [vmem:[%s3 + $0x34] sm:$0xf]
  %v652 = vld [vmem:[%s3 + $0x38] sm:$0xf]
  %v653 = vld [vmem:[%s3 + $0x3c] sm:$0xf]
  %v654 = vld [vmem:[%s4] sm:$0x1]
  %v656 = vlaneseq
  %v657 = vshrl.u32 %v656, 7
  %v658 = vsub.s32 0, %v657
  %v659 = vrot.slane %v654, %v658
  %v677 = vunpack.c.l.b16 %v638
  %v678 = vunpack.c.l.b16 %v639
  %v679 = vunpack.c.l.b16 %v640
  %v680 = vunpack.c.l.b16 %v641
  %v681 = vunpack.c.l.b16 %v642
  %v682 = vunpack.c.l.b16 %v643
  %v683 = vunpack.c.l.b16 %v644
  %v684 = vunpack.c.l.b16 %v645
  %v685 = vunpack.c.l.b16 %v646
  %v686 = vunpack.c.l.b16 %v647
  %v687 = vunpack.c.l.b16 %v648
  %v688 = vunpack.c.l.b16 %v649
  %v689 = vunpack.c.l.b16 %v650
  %v690 = vunpack.c.l.b16 %v651
  %v691 = vunpack.c.l.b16 %v652
  %v692 = vunpack.c.l.b16 %v653
  %v693 = vpack.c.b16 %v678, %v677
  %v694 = vpack.c.b16 %v680, %v679
  %v695 = vpack.c.b16 %v682, %v681
  %v696 = vpack.c.b16 %v684, %v683
  %v697 = vpack.c.b16 %v686, %v685
  %v698 = vpack.c.b16 %v688, %v687
  %v699 = vpack.c.b16 %v690, %v689
  %v700 = vpack.c.b16 %v692, %v691
  %709 = vmatprep.subr.bf16.mxu0 0
  %710 = vmatpush1.bf16.msra.mxu0 %v693
  %711 = vmatprep.subr.bf16.mxu0 0
  %712 = vmatpush1.bf16.msra.mxu0 %v694
  %713 = vmatprep.subr.bf16.mxu0 0
  %714 = vmatpush1.bf16.msra.mxu0 %v695
  %715 = vmatprep.subr.bf16.mxu0 0
  %716 = vmatpush1.bf16.msra.mxu0 %v696
  %717 = vmatprep.subr.bf16.mxu0 0
  %718 = vmatpush1.bf16.msra.mxu0 %v697
  %719 = vmatprep.subr.bf16.mxu0 0
  %720 = vmatpush1.bf16.msra.mxu0 %v698
  %721 = vmatprep.subr.bf16.mxu0 0
  %722 = vmatpush1.bf16.msra.mxu0 %v699
  %723 = vmatprep.subr.bf16.mxu0 0
  %724 = vmatpush1.bf16.msra.mxu0 %v700
  %725 = vmatprep.subr.bf16.mxu0 0
  %726 = vmatpush1.bf16.msra.mxu0 0
  %727 = vmatprep.subr.bf16.mxu0 0
  %728 = vmatpush1.bf16.msra.mxu0 0
  %729 = vmatprep.subr.bf16.mxu0 0
  %730 = vmatpush1.bf16.msra.mxu0 0
  %731 = vmatprep.subr.bf16.mxu0 0
  %732 = vmatpush1.bf16.msra.mxu0 0
  %733 = vmatprep.subr.bf16.mxu0 0
  %734 = vmatpush1.bf16.msra.mxu0 0
  %735 = vmatprep.subr.bf16.mxu0 0
  %736 = vmatpush1.bf16.msra.mxu0 0
  %737 = vmatprep.subr.bf16.mxu0 0
  %738 = vmatpush1.bf16.msra.mxu0 0
  %739 = vmatprep.subr.bf16.mxu0 0
  %740 = vmatpush1.bf16.msra.mxu0 0
  %741 = vmatprep.mubr.bf16.mxu0 0
  %742 = vmatmul.mubr.bf16.gmra.mrb[0].mxu0 %v606
  %v743 = vpop.f32.mrb[0].mxu0
  %v744 = vadd.f32 %v659, %v743
  %v745 = vpop.f32.mrb[0].mxu0
  %v746 = vpop.f32.mrb[0].mxu0
  %v747 = vadd.f32 %v659, %v746
  %v748 = vpop.f32.mrb[0].mxu0
  %749 = vmatprep.mubr.bf16.mxu0 0
  %750 = vmatmul.mubr.bf16.gmra.mrb[0].mxu0 %v607
  %v751 = vpop.f32.mrb[0].mxu0
  %v752 = vadd.f32 %v659, %v751
  %v753 = vpop.f32.mrb[0].mxu0
  %v754 = vpop.f32.mrb[0].mxu0
  %v755 = vadd.f32 %v659, %v754
  %v756 = vpop.f32.mrb[0].mxu0
  %757 = vmatprep.mubr.bf16.mxu0 0
  %758 = vmatmul.mubr.bf16.gmra.mrb[0].mxu0 %v608
  %v759 = vpop.f32.mrb[0].mxu0
  %v760 = vadd.f32 %v659, %v759
  %v761 = vpop.f32.mrb[0].mxu0
  %v762 = vpop.f32.mrb[0].mxu0
  %v763 = vadd.f32 %v659, %v762
  %v764 = vpop.f32.mrb[0].mxu0
  %765 = vmatprep.mubr.bf16.mxu0 0
  %766 = vmatmul.mubr.bf16.gmra.mrb[0].mxu0 %v609
  %v767 = vpop.f32.mrb[0].mxu0
  %v768 = vadd.f32 %v659, %v767
  %v769 = vpop.f32.mrb[0].mxu0
  %v770 = vpop.f32.mrb[0].mxu0
  %v771 = vadd.f32 %v659, %v770
  %v772 = vpop.f32.mrb[0].mxu0
  %773 = vmatprep.mubr.bf16.mxu0 0
  %774 = vmatmul.mubr.bf16.gmra.mrb[0].mxu0 %v610
  %v775 = vpop.f32.mrb[0].mxu0
  %v776 = vadd.f32 %v659, %v775
  %v777 = vpop.f32.mrb[0].mxu0
  %v778 = vpop.f32.mrb[0].mxu0
  %v779 = vadd.f32 %v659, %v778
  %v780 = vpop.f32.mrb[0].mxu0
  %781 = vmatprep.mubr.bf16.mxu0 0
  %782 = vmatmul.mubr.bf16.gmra.mrb[0].mxu0 %v611
  %v783 = vpop.f32.mrb[0].mxu0
  %v784 = vadd.f32 %v659, %v783
  %v785 = vpop.f32.mrb[0].mxu0
  %v786 = vpop.f32.mrb[0].mxu0
  %v787 = vadd.f32 %v659, %v786
  %v788 = vpop.f32.mrb[0].mxu0
  %789 = vmatprep.mubr.bf16.mxu0 0
  %790 = vmatmul.mubr.bf16.gmra.mrb[0].mxu0 %v612
  %v791 = vpop.f32.mrb[0].mxu0
  %v792 = vadd.f32 %v659, %v791
  %v793 = vpop.f32.mrb[0].mxu0
  %v794 = vpop.f32.mrb[0].mxu0
  %v795 = vadd.f32 %v659, %v794
  %v796 = vpop.f32.mrb[0].mxu0
  %797 = vmatprep.mubr.bf16.mxu0 0
  %798 = vmatmul.mubr.bf16.gmra.mrb[0].mxu0 %v613
  %v799 = vpop.f32.mrb[0].mxu0
  %v800 = vadd.f32 %v659, %v799
  %v801 = vpop.f32.mrb[0].mxu0
  %v802 = vpop.f32.mrb[0].mxu0
  %v803 = vadd.f32 %v659, %v802
  %v804 = vpop.f32.mrb[0].mxu0
  %805 = vmatprep.mubr.bf16.mxu0 0
  %806 = vmatmul.mubr.bf16.gmra.mrb[0].mxu0 %v614
  %v807 = vpop.f32.mrb[0].mxu0
  %v808 = vadd.f32 %v659, %v807
  %v809 = vpop.f32.mrb[0].mxu0
  %v810 = vpop.f32.mrb[0].mxu0
  %v811 = vadd.f32 %v659, %v810
  %v812 = vpop.f32.mrb[0].mxu0
  %813 = vmatprep.mubr.bf16.mxu0 0
  %814 = vmatmul.mubr.bf16.gmra.mrb[0].mxu0 %v615
  %v815 = vpop.f32.mrb[0].mxu0
  %v816 = vadd.f32 %v659, %v815
  %v817 = vpop.f32.mrb[0].mxu0
  %v818 = vpop.f32.mrb[0].mxu0
  %v819 = vadd.f32 %v659, %v818
  %v820 = vpop.f32.mrb[0].mxu0
  %821 = vmatprep.mubr.bf16.mxu0 0
  %822 = vmatmul.mubr.bf16.gmra.mrb[0].mxu0 %v616
  %v823 = vpop.f32.mrb[0].mxu0
  %v824 = vadd.f32 %v659, %v823
  %v825 = vpop.f32.mrb[0].mxu0
  %v826 = vpop.f32.mrb[0].mxu0
  %v827 = vadd.f32 %v659, %v826
  %v828 = vpop.f32.mrb[0].mxu0
  %829 = vmatprep.mubr.bf16.mxu0 0
  %830 = vmatmul.mubr.bf16.gmra.mrb[0].mxu0 %v617
  %v831 = vpop.f32.mrb[0].mxu0
  %v832 = vadd.f32 %v659, %v831
  %v833 = vpop.f32.mrb[0].mxu0
  %v834 = vpop.f32.mrb[0].mxu0
  %v835 = vadd.f32 %v659, %v834
  %v836 = vpop.f32.mrb[0].mxu0
  %837 = vmatprep.mubr.bf16.mxu0 0
  %838 = vmatmul.mubr.bf16.gmra.mrb[0].mxu0 %v618
  %v839 = vpop.f32.mrb[0].mxu0
  %v840 = vadd.f32 %v659, %v839
  %v841 = vpop.f32.mrb[0].mxu0
  %v842 = vpop.f32.mrb[0].mxu0
  %v843 = vadd.f32 %v659, %v842
  %v844 = vpop.f32.mrb[0].mxu0
  %845 = vmatprep.mubr.bf16.mxu0 0
  %846 = vmatmul.mubr.bf16.gmra.mrb[0].mxu0 %v619
  %v847 = vpop.f32.mrb[0].mxu0
  %v848 = vadd.f32 %v659, %v847
  %v849 = vpop.f32.mrb[0].mxu0
  %v850 = vpop.f32.mrb[0].mxu0
  %v851 = vadd.f32 %v659, %v850
  %v852 = vpop.f32.mrb[0].mxu0
  %853 = vmatprep.mubr.bf16.mxu0 0
  %854 = vmatmul.mubr.bf16.gmra.mrb[0].mxu0 %v620
  %v855 = vpop.f32.mrb[0].mxu0
  %v856 = vadd.f32 %v659, %v855
  %v857 = vpop.f32.mrb[0].mxu0
  %v858 = vpop.f32.mrb[0].mxu0
  %v859 = vadd.f32 %v659, %v858
  %v860 = vpop.f32.mrb[0].mxu0
  %861 = vmatprep.mubr.bf16.mxu0 0
  %862 = vmatmul.mubr.bf16.gmra.mrb[0].mxu0 %v621
  %v863 = vpop.f32.mrb[0].mxu0
  %v864 = vadd.f32 %v659, %v863
  %v865 = vpop.f32.mrb[0].mxu0
  %v866 = vpop.f32.mrb[0].mxu0
  %v867 = vadd.f32 %v659, %v866
  %v868 = vpop.f32.mrb[0].mxu0
  %869 = vmatprep.mubr.bf16.mxu0 0
  %870 = vmatmul.mubr.bf16.gmra.mrb[0].mxu0 %v622
  %v871 = vpop.f32.mrb[0].mxu0
  %v872 = vadd.f32 %v659, %v871
  %v873 = vpop.f32.mrb[0].mxu0
  %v874 = vpop.f32.mrb[0].mxu0
  %v875 = vadd.f32 %v659, %v874
  %v876 = vpop.f32.mrb[0].mxu0
  %877 = vmatprep.mubr.bf16.mxu0 0
  %878 = vmatmul.mubr.bf16.gmra.mrb[0].mxu0 %v623
  %v879 = vpop.f32.mrb[0].mxu0
  %v880 = vadd.f32 %v659, %v879
  %v881 = vpop.f32.mrb[0].mxu0
  %v882 = vpop.f32.mrb[0].mxu0
  %v883 = vadd.f32 %v659, %v882
  %v884 = vpop.f32.mrb[0].mxu0
  %885 = vmatprep.mubr.bf16.mxu0 0
  %886 = vmatmul.mubr.bf16.gmra.mrb[0].mxu0 %v624
  %v887 = vpop.f32.mrb[0].mxu0
  %v888 = vadd.f32 %v659, %v887
  %v889 = vpop.f32.mrb[0].mxu0
  %v890 = vpop.f32.mrb[0].mxu0
  %v891 = vadd.f32 %v659, %v890
  %v892 = vpop.f32.mrb[0].mxu0
  %893 = vmatprep.mubr.bf16.mxu0 0
  %894 = vmatmul.mubr.bf16.gmra.mrb[0].mxu0 %v625
  %v895 = vpop.f32.mrb[0].mxu0
  %v896 = vadd.f32 %v659, %v895
  %v897 = vpop.f32.mrb[0].mxu0
  %v898 = vpop.f32.mrb[0].mxu0
  %v899 = vadd.f32 %v659, %v898
  %v900 = vpop.f32.mrb[0].mxu0
  %901 = vmatprep.mubr.bf16.mxu0 0
  %902 = vmatmul.mubr.bf16.gmra.mrb[0].mxu0 %v626
  %v903 = vpop.f32.mrb[0].mxu0
  %v904 = vadd.f32 %v659, %v903
  %v905 = vpop.f32.mrb[0].mxu0
  %v906 = vpop.f32.mrb[0].mxu0
  %v907 = vadd.f32 %v659, %v906
  %v908 = vpop.f32.mrb[0].mxu0
  %909 = vmatprep.mubr.bf16.mxu0 0
  %910 = vmatmul.mubr.bf16.gmra.mrb[0].mxu0 %v627
  %v911 = vpop.f32.mrb[0].mxu0
  %v912 = vadd.f32 %v659, %v911
  %v913 = vpop.f32.mrb[0].mxu0
  %v914 = vpop.f32.mrb[0].mxu0
  %v915 = vadd.f32 %v659, %v914
  %v916 = vpop.f32.mrb[0].mxu0
  %917 = vmatprep.mubr.bf16.mxu0 0
  %918 = vmatmul.mubr.bf16.gmra.mrb[0].mxu0 %v628
  %v919 = vpop.f32.mrb[0].mxu0
  %v920 = vadd.f32 %v659, %v919
  %v921 = vpop.f32.mrb[0].mxu0
  %v922 = vpop.f32.mrb[0].mxu0
  %v923 = vadd.f32 %v659, %v922
  %v924 = vpop.f32.mrb[0].mxu0
  %925 = vmatprep.mubr.bf16.mxu0 0
  %926 = vmatmul.mubr.bf16.gmra.mrb[0].mxu0 %v629
  %v927 = vpop.f32.mrb[0].mxu0
  %v928 = vadd.f32 %v659, %v927
  %v929 = vpop.f32.mrb[0].mxu0
  %v930 = vpop.f32.mrb[0].mxu0
  %v931 = vadd.f32 %v659, %v930
  %v932 = vpop.f32.mrb[0].mxu0
  %933 = vmatprep.mubr.bf16.mxu0 0
  %934 = vmatmul.mubr.bf16.gmra.mrb[0].mxu0 %v630
  %v935 = vpop.f32.mrb[0].mxu0
  %v936 = vadd.f32 %v659, %v935
  %v937 = vpop.f32.mrb[0].mxu0
  %v938 = vpop.f32.mrb[0].mxu0
  %v939 = vadd.f32 %v659, %v938
  %v940 = vpop.f32.mrb[0].mxu0
  %941 = vmatprep.mubr.bf16.mxu0 0
  %942 = vmatmul.mubr.bf16.gmra.mrb[0].mxu0 %v631
  %v943 = vpop.f32.mrb[0].mxu0
  %v944 = vadd.f32 %v659, %v943
  %v945 = vpop.f32.mrb[0].mxu0
  %v946 = vpop.f32.mrb[0].mxu0
  %v947 = vadd.f32 %v659, %v946
  %v948 = vpop.f32.mrb[0].mxu0
  %949 = vmatprep.mubr.bf16.mxu0 0
  %950 = vmatmul.mubr.bf16.gmra.mrb[0].mxu0 %v632
  %v951 = vpop.f32.mrb[0].mxu0
  %v952 = vadd.f32 %v659, %v951
  %v953 = vpop.f32.mrb[0].mxu0
  %v954 = vpop.f32.mrb[0].mxu0
  %v955 = vadd.f32 %v659, %v954
  %v956 = vpop.f32.mrb[0].mxu0
  %957 = vmatprep.mubr.bf16.mxu0 0
  %958 = vmatmul.mubr.bf16.gmra.mrb[0].mxu0 %v633
  %v959 = vpop.f32.mrb[0].mxu0
  %v960 = vadd.f32 %v659, %v959
  %v961 = vpop.f32.mrb[0].mxu0
  %v962 = vpop.f32.mrb[0].mxu0
  %v963 = vadd.f32 %v659, %v962
  %v964 = vpop.f32.mrb[0].mxu0
  %965 = vmatprep.mubr.bf16.mxu0 0
  %966 = vmatmul.mubr.bf16.gmra.mrb[0].mxu0 %v634
  %v967 = vpop.f32.mrb[0].mxu0
  %v968 = vadd.f32 %v659, %v967
  %v969 = vpop.f32.mrb[0].mxu0
  %v970 = vpop.f32.mrb[0].mxu0
  %v971 = vadd.f32 %v659, %v970
  %v972 = vpop.f32.mrb[0].mxu0
  %973 = vmatprep.mubr.bf16.mxu0 0
  %974 = vmatmul.mubr.bf16.gmra.mrb[0].mxu0 %v635
  %v975 = vpop.f32.mrb[0].mxu0
  %v976 = vadd.f32 %v659, %v975
  %v977 = vpop.f32.mrb[0].mxu0
  %v978 = vpop.f32.mrb[0].mxu0
  %v979 = vadd.f32 %v659, %v978
  %v980 = vpop.f32.mrb[0].mxu0
  %981 = vmatprep.mubr.bf16.mxu0 0
  %982 = vmatmul.mubr.bf16.gmra.mrb[0].mxu0 %v636
  %v983 = vpop.f32.mrb[0].mxu0
  %v984 = vadd.f32 %v659, %v983
  %v985 = vpop.f32.mrb[0].mxu0
  %v986 = vpop.f32.mrb[0].mxu0
  %v987 = vadd.f32 %v659, %v986
  %v988 = vpop.f32.mrb[0].mxu0
  %989 = vmatprep.mubr.bf16.mxu0 0
  %990 = vmatmul.mubr.bf16.gmra.mrb[0].mxu0 %v637
  %v991 = vpop.f32.mrb[0].mxu0
  %v992 = vadd.f32 %v659, %v991
  %v993 = vpop.f32.mrb[0].mxu0
  %v994 = vpop.f32.mrb[0].mxu0
  %v995 = vadd.f32 %v659, %v994
  %v996 = vpop.f32.mrb[0].mxu0
  %997 = vdwg.mxu0
  %998 = vst [vmem:[%s5] sm:$0xff] %v744
  %999 = vst [vmem:[%s5 + $0x8] sm:$0xff] %v747
  %1000 = vst [vmem:[%s5 + $0x10] sm:$0xff] %v752
  %1001 = vst [vmem:[%s5 + $0x18] sm:$0xff] %v755
  %1002 = vst [vmem:[%s5 + $0x20] sm:$0xff] %v760
  %1003 = vst [vmem:[%s5 + $0x28] sm:$0xff] %v763
  %1004 = vst [vmem:[%s5 + $0x30] sm:$0xff] %v768
  %1005 = vst [vmem:[%s5 + $0x38] sm:$0xff] %v771
  %1006 = vst [vmem:[%s5 + $0x40] sm:$0xff] %v776
  %1007 = vst [vmem:[%s5 + $0x48] sm:$0xff] %v779
  %1008 = vst [vmem:[%s5 + $0x50] sm:$0xff] %v784
  %1009 = vst [vmem:[%s5 + $0x58] sm:$0xff] %v787
  %1010 = vst [vmem:[%s5 + $0x60] sm:$0xff] %v792
  %1011 = vst [vmem:[%s5 + $0x68] sm:$0xff] %v795
  %1012 = vst [vmem:[%s5 + $0x70] sm:$0xff] %v800
  %1013 = vst [vmem:[%s5 + $0x78] sm:$0xff] %v803
  %1014 = vst [vmem:[%s5 + $0x80] sm:$0xff] %v808
  %1015 = vst [vmem:[%s5 + $0x88] sm:$0xff] %v811
  %1016 = vst [vmem:[%s5 + $0x90] sm:$0xff] %v816
  %1017 = vst [vmem:[%s5 + $0x98] sm:$0xff] %v819
  %1018 = vst [vmem:[%s5 + $0xa0] sm:$0xff] %v824
  %1019 = vst [vmem:[%s5 + $0xa8] sm:$0xff] %v827
  %1020 = vst [vmem:[%s5 + $0xb0] sm:$0xff] %v832
  %1021 = vst [vmem:[%s5 + $0xb8] sm:$0xff] %v835
  %1022 = vst [vmem:[%s5 + $0xc0] sm:$0xff] %v840
  %1023 = vst [vmem:[%s5 + $0xc8] sm:$0xff] %v843
  %1024 = vst [vmem:[%s5 + $0xd0] sm:$0xff] %v848
  %1025 = vst [vmem:[%s5 + $0xd8] sm:$0xff] %v851
  %1026 = vst [vmem:[%s5 + $0xe0] sm:$0xff] %v856
  %1027 = vst [vmem:[%s5 + $0xe8] sm:$0xff] %v859
  %1028 = vst [vmem:[%s5 + $0xf0] sm:$0xff] %v864
  %1029 = vst [vmem:[%s5 + $0xf8] sm:$0xff] %v867
  %1030 = vst [vmem:[%s5 + $0x100] sm:$0xff] %v872
  %1031 = vst [vmem:[%s5 + $0x108] sm:$0xff] %v875
  %1032 = vst [vmem:[%s5 + $0x110] sm:$0xff] %v880
  %1033 = vst [vmem:[%s5 + $0x118] sm:$0xff] %v883
  %1034 = vst [vmem:[%s5 + $0x120] sm:$0xff] %v888
  %1035 = vst [vmem:[%s5 + $0x128] sm:$0xff] %v891
  %1036 = vst [vmem:[%s5 + $0x130] sm:$0xff] %v896
  %1037 = vst [vmem:[%s5 + $0x138] sm:$0xff] %v899
  %1038 = vst [vmem:[%s5 + $0x140] sm:$0xff] %v904
  %1039 = vst [vmem:[%s5 + $0x148] sm:$0xff] %v907
  %1040 = vst [vmem:[%s5 + $0x150] sm:$0xff] %v912
  %1041 = vst [vmem:[%s5 + $0x158] sm:$0xff] %v915
  %1042 = vst [vmem:[%s5 + $0x160] sm:$0xff] %v920
  %1043 = vst [vmem:[%s5 + $0x168] sm:$0xff] %v923
  %1044 = vst [vmem:[%s5 + $0x170] sm:$0xff] %v928
  %1045 = vst [vmem:[%s5 + $0x178] sm:$0xff] %v931
  %1046 = vst [vmem:[%s5 + $0x180] sm:$0xff] %v936
  %1047 = vst [vmem:[%s5 + $0x188] sm:$0xff] %v939
  %1048 = vst [vmem:[%s5 + $0x190] sm:$0xff] %v944
  %1049 = vst [vmem:[%s5 + $0x198] sm:$0xff] %v947
  %1050 = vst [vmem:[%s5 + $0x1a0] sm:$0xff] %v952
  %1051 = vst [vmem:[%s5 + $0x1a8] sm:$0xff] %v955
  %1052 = vst [vmem:[%s5 + $0x1b0] sm:$0xff] %v960
  %1053 = vst [vmem:[%s5 + $0x1b8] sm:$0xff] %v963
  %1054 = vst [vmem:[%s5 + $0x1c0] sm:$0xff] %v968
  %1055 = vst [vmem:[%s5 + $0x1c8] sm:$0xff] %v971
  %1056 = vst [vmem:[%s5 + $0x1d0] sm:$0xff] %v976
  %1057 = vst [vmem:[%s5 + $0x1d8] sm:$0xff] %v979
  %1058 = vst [vmem:[%s5 + $0x1e0] sm:$0xff] %v984
  %1059 = vst [vmem:[%s5 + $0x1e8] sm:$0xff] %v987
  %1060 = vst [vmem:[%s5 + $0x1f0] sm:$0xff] %v992
  %1061 = vst [vmem:[%s5 + $0x1f8] sm:$0xff] %v995
  // Predicated region
  $region22: #{tpu_custom_call.1} parent=0 // pred_check
    _
  $region23: #{tpu_custom_call.1} parent=0 // pred_check_branch
    %1063 = sbr.rel (0) target = $region25
  $region24: #{tpu_custom_call.1} parent=0 // pred_region
    _
  $region25: #{tpu_custom_call.1} parent=0 // pred_fallthru
    _
  // Predicated region
  $region26: #{tpu_custom_call.1} parent=0 // pred_check
    _
  $region27: #{tpu_custom_call.1} parent=0 // pred_check_branch
    %1065 = sbr.rel (0) target = $region29
  $region28: #{tpu_custom_call.1} parent=0 // pred_region
    _
  $region29: #{tpu_custom_call.1} parent=0 // pred_fallthru
    _

</llo_original>
